<compile_context>
chip_gen: v5e
topology: v5e:2x2
jax: 0.10.0
libtpu: 0.0.40
codegen_flags: <defaults>
</compile_context>

<pallas_src>
import jax
import jax.numpy as jnp
from jax.experimental import pallas as pl
from jax.experimental.pallas import tpu as pltpu


_LANE = 128
_TARGET_BLOCK_BYTES = 4 * 1024 * 1024  # ~4 MiB per buffer
_VMEM_LIMIT_BYTES = 32 * 1024 * 1024   # safe on v5e/v6e (128 MiB) and v7x (64 MiB)


def _sublane_multiple(dtype) -> int:
    """Minimum second-minor tile multiple for this dtype."""
    itemsize = jnp.dtype(dtype).itemsize
    return {4: 8, 2: 16, 1: 32}.get(itemsize, 8)


def _brightness_kernel(factor_ref, apply_ref, x_ref, o_ref):
    # factor_ref: SMEM f32 (1,)   apply_ref: SMEM i32 (1,)
    # x_ref / o_ref: VMEM (TR, LANES) tiles.
    @pl.when(apply_ref[0] != 0)
    def _():
        f = factor_ref[0]                       # f32 scalar
        x32 = x_ref[...].astype(jnp.float32)
        o_ref[...] = jnp.clip(x32 * f, 0.0, 1.0).astype(o_ref.dtype)

    @pl.when(apply_ref[0] == 0)
    def _():
        o_ref[...] = x_ref[...]


def adjust_brightness_pallas(img, factor, apply_flag):
    """out = apply ? clamp(img * factor, 0, 1) : img, fused in one HBM pass."""
    orig_shape = img.shape
    dtype = img.dtype
    itemsize = jnp.dtype(dtype).itemsize
    sub = _sublane_multiple(dtype)

    total = 1
    for d in orig_shape:
        total *= int(d)

    # ---- lane-dense 2D slab; prefer the no-pad fast path -------------------
    lanes = None
    for cand in (8192, 4096, 2048, 1024, 512, 256, _LANE):
        if total % cand == 0:
            lanes = cand
            break

    flat = img.reshape(-1)
    if lanes is None:
        # ragged fallback: pad to whole 128-lane rows (rare for NCHW images)
        lanes = _LANE
        rows = -(-total // lanes)
        flat = jnp.pad(flat, (0, rows * lanes - total))
    else:
        rows = total // lanes
    x2d = flat.reshape(rows, lanes)

    # ---- row tile: ~4 MiB per buffer, multiple of the sublane tiling -------
    tr = max(sub, (_TARGET_BLOCK_BYTES // (lanes * itemsize)) // sub * sub)
    if tr >= rows:
        tr = rows                      # full-dim block is always legal
    grid_rows = -(-rows // tr)         # partial last block is masked by Pallas

    factor_arr = jnp.asarray(factor, dtype=jnp.float32).reshape(1)
    apply_arr = jnp.asarray(apply_flag, dtype=jnp.int32).reshape(1)

    out2d = pl.pallas_call(
        _brightness_kernel,
        out_shape=jax.ShapeDtypeStruct((rows, lanes), dtype),
        grid_spec=pltpu.PrefetchScalarGridSpec(
            num_scalar_prefetch=0,
            grid=(grid_rows,),
            in_specs=[
                pl.BlockSpec(memory_space=pltpu.SMEM),      # factor (f32)
                pl.BlockSpec(memory_space=pltpu.SMEM),      # apply flag (i32)
                pl.BlockSpec((tr, lanes), lambda i: (i, 0)),
            ],
            out_specs=pl.BlockSpec((tr, lanes), lambda i: (i, 0)),
        ),
        compiler_params=pltpu.CompilerParams(
            dimension_semantics=("parallel",),   # shard tiles over v7x's 2 TCs
            vmem_limit_bytes=_VMEM_LIMIT_BYTES,
        ),
    )(factor_arr, apply_arr, x2d)

    out_flat = out2d.reshape(-1)
    if out_flat.shape[0] != total:
        out_flat = out_flat[:total]
    return out_flat.reshape(orig_shape)


def brightness_forward(img, label=None, *, bounds=(0.9, 0.9), p=0.5, key=None):
    """Mirrors Brightness.forward; randomness drawn deterministically from `key`."""
    if key is None:
        key = jax.random.PRNGKey(0)
    k_factor, k_coin = jax.random.split(key)
    factor = jax.random.uniform(k_factor, (), dtype=jnp.float32,
                                minval=bounds[0], maxval=bounds[1])
    coin = jax.random.uniform(k_coin, (), dtype=jnp.float32)
    apply_flag = (coin < p).astype(jnp.int32)
    out = adjust_brightness_pallas(img, factor, apply_flag)
    return out, label


if __name__ == "__main__":
    key = jax.random.PRNGKey(0)
    img = jax.random.uniform(key, (2, 4, 16, 16), dtype=jnp.float32)  # NCHW in [0,1)

    # --- deterministic checks of both fused branches -----------------------
    out_on = jax.block_until_ready(
        adjust_brightness_pallas(img, jnp.float32(0.9), jnp.int32(1)))
    assert jnp.allclose(out_on, jnp.clip(img * 0.9, 0.0, 1.0), atol=1e-6)

    out_off = jax.block_until_ready(
        adjust_brightness_pallas(img, jnp.float32(0.9), jnp.int32(0)))
    assert jnp.allclose(out_off, img, atol=1e-6)

    # --- ragged shape exercises the padded-fallback path --------------------
    img_r = jax.random.uniform(jax.random.PRNGKey(1), (2, 3, 5, 7),
                               dtype=jnp.float32)
    out_r = jax.block_until_ready(
        adjust_brightness_pallas(img_r, jnp.float32(0.5), jnp.int32(1)))
    assert jnp.allclose(out_r, jnp.clip(img_r * 0.5, 0.0, 1.0), atol=1e-6)

    # --- full forward pass (random coin, matches one of the two branches) --
    out, label = brightness_forward(img, label=None, bounds=(0.9, 0.9), p=0.5,
                                    key=jax.random.PRNGKey(0))
    out = jax.block_until_ready(out)
    bright_ref = jnp.clip(img * 0.9, 0.0, 1.0)
    ok = bool(jnp.allclose(out, img, atol=1e-6) or
              jnp.allclose(out, bright_ref, atol=1e-6))
    assert ok, "output matches neither branch"
    assert out.shape == img.shape and out.dtype == img.dtype
    assert label is None

    print("KERNEL_OK")
</pallas_src>

<mosaic_0001>
module attributes {stable_mosaic.version = 11 : i64} {
  func.func @_brightness_kernel(%arg0: i32, %arg1: memref<1xf32, #tpu.memory_space<smem>>, %arg2: memref<1xi32, #tpu.memory_space<smem>>, %arg3: memref<1x2048xf32, #tpu.memory_space<vmem>>, %arg4: memref<1x2048xf32, #tpu.memory_space<vmem>>) attributes {dimension_semantics = [#tpu.dimension_semantics<parallel>], iteration_bounds = array<i64: 1>, scalar_prefetch = 0 : i64, scratch_operands = 0 : i64, tpu.core_type = #tpu.core_type<tc>, window_params = [{transform_indices = @transform_0, window_bounds = array<i64: 1>}, {transform_indices = @transform_1, window_bounds = array<i64: 1>}, {transform_indices = @transform_2, window_bounds = array<i64: 1, 2048>}, {transform_indices = @transform_3, window_bounds = array<i64: 1, 2048>}]} {
    %c0 = arith.constant 0 : index
    %0 = memref.load %arg2[%c0] : memref<1xi32, #tpu.memory_space<smem>>
    %c0_i32 = arith.constant 0 : i32
    %1 = arith.cmpi ne, %0, %c0_i32 : i32
    %2 = arith.extui %1 : i1 to i32
    %c0_i32_0 = arith.constant 0 : i32
    %3 = arith.cmpi ne, %2, %c0_i32_0 : i32
    scf.if %3 {
      %c0_4 = arith.constant 0 : index
      %8 = memref.load %arg1[%c0_4] : memref<1xf32, #tpu.memory_space<smem>>
      %c0_5 = arith.constant 0 : index
      %c0_6 = arith.constant 0 : index
      %9 = vector.load %arg3[%c0_5, %c0_6] : memref<1x2048xf32, #tpu.memory_space<vmem>>, vector<1x2048xf32>
      %10 = vector.broadcast %8 : f32 to vector<1x2048xf32>
      %11 = arith.mulf %9, %10 : vector<1x2048xf32>
      %cst = arith.constant 0.000000e+00 : f32
      %cst_7 = arith.constant 1.000000e+00 : f32
      %12 = vector.broadcast %cst : f32 to vector<1x2048xf32>
      %13 = arith.maximumf %12, %11 : vector<1x2048xf32>
      %14 = vector.broadcast %cst_7 : f32 to vector<1x2048xf32>
      %15 = arith.minimumf %14, %13 : vector<1x2048xf32>
      %c0_8 = arith.constant 0 : index
      %c0_9 = arith.constant 0 : index
      %16 = vector.load %arg4[%c0_8, %c0_9] : memref<1x2048xf32, #tpu.memory_space<vmem>>, vector<1x2048xf32>
      tpu.vector_store %arg4[%c0_8, %c0_9], %15 {strides = array<i32>} : memref<1x2048xf32, #tpu.memory_space<vmem>>, vector<1x2048xf32>,
    } else {
    }
    %c0_1 = arith.constant 0 : index
    %4 = memref.load %arg2[%c0_1] : memref<1xi32, #tpu.memory_space<smem>>
    %c0_i32_2 = arith.constant 0 : i32
    %5 = arith.cmpi eq, %4, %c0_i32_2 : i32
    %6 = arith.extui %5 : i1 to i32
    %c0_i32_3 = arith.constant 0 : i32
    %7 = arith.cmpi ne, %6, %c0_i32_3 : i32
    scf.if %7 {
      %c0_4 = arith.constant 0 : index
      %c0_5 = arith.constant 0 : index
      %8 = vector.load %arg3[%c0_4, %c0_5] : memref<1x2048xf32, #tpu.memory_space<vmem>>, vector<1x2048xf32>
      %c0_6 = arith.constant 0 : index
      %c0_7 = arith.constant 0 : index
      %9 = vector.load %arg4[%c0_6, %c0_7] : memref<1x2048xf32, #tpu.memory_space<vmem>>, vector<1x2048xf32>
      tpu.vector_store %arg4[%c0_6, %c0_7], %8 {strides = array<i32>} : memref<1x2048xf32, #tpu.memory_space<vmem>>, vector<1x2048xf32>,
    } else {
    }
    return
  }
  func.func @transform_0(%arg0: i32) -> i32 {
    %c0_i32 = arith.constant 0 : i32
    %c0_i32_0 = arith.constant 0 : i32
    return %c0_i32 : i32
  }
  func.func @transform_1(%arg0: i32) -> i32 {
    %c0_i32 = arith.constant 0 : i32
    %c0_i32_0 = arith.constant 0 : i32
    return %c0_i32 : i32
  }
  func.func @transform_2(%arg0: i32) -> (i32, i32) {
    %c0_i32 = arith.constant 0 : i32
    %c0_i32_0 = arith.constant 0 : i32
    return %arg0, %c0_i32 : i32, i32
  }
  func.func @transform_3(%arg0: i32) -> (i32, i32) {
    %c0_i32 = arith.constant 0 : i32
    %c0_i32_0 = arith.constant 0 : i32
    return %arg0, %c0_i32 : i32, i32
  }
}

</mosaic_0001>

<llo_original>
// kernel: tpu_custom_call.1
$region0: #{tpu_custom_call.1}
  #allocation0 [shape = 'u32[]', space=smem, size = 0x4, offset = 0x4, fixed_abs, tag = 'smem constant byte address 0x4 - core index']
  #allocation1 [shape = 'u32[72,128]{1,0:T(1,128)}', space=vmem, size = 0x9000, scoped, tag = 'internal scratch']
  #allocation2 [shape = 'f32[1]{0:T(128)S(6)}', space=smem, size = 0x200, scoped, tag = 'scoped memory for tpu_custom_call.1']
  #allocation3 [shape = 's32[1]{0:T(128)S(6)}', space=smem, size = 0x200, scoped, tag = 'scoped memory for tpu_custom_call.1']
  %s0 = inlined_call_operand.<no memory space> [shape: f32[1], index: 0, kind: input, shape index: {}]
  %s1 = inlined_call_operand.<no memory space> [shape: s32[1], index: 1, kind: input, shape index: {}]
  %s2 = inlined_call_operand.hbm [shape: f32[1,2048], index: 2, kind: input, shape index: {}]
  %s3 = inlined_call_operand.hbm [shape: f32[1,2048], index: 3, kind: output, shape index: {}]
  %s4 = sld [smem:[#allocation0]]
  $region34: #{tpu_custom_call.1} parent=0
    _
  %s6 = ssub.s32 1, %s4
  %s7 = scalar_select 0, %s6, %s4
  %8 = sst [smem:[#allocation2]] %s0
  %9 = sst [smem:[#allocation3]] %s1
  $region1: #{tpu_custom_call.1} parent=0
    #allocation4 [shape = 'u8[8192]{0}', space=vmem, size = 0x2000, scoped, tag = 'input window, operand 2, single buffered']
    #allocation5 [shape = 's32[1]{0}', space=sflag, size = 0x4, scoped, tag = 'scoped memory for tpu_custom_call.1']
    #allocation6 [shape = 's32[1]{0}', space=sflag, size = 0x4, scoped, tag = 'scoped memory for tpu_custom_call.1']
    #allocation7 [shape = 'u8[8192]{0}', space=vmem, size = 0x2000, scoped, tag = 'output window, operand 0, single buffered']
    %10 = vsyncpa [#allocation5], 0
    %11 = vsyncpa [#allocation6], 0
    // Predicated region
    $region2: #{tpu_custom_call.1} parent=1 // pred_check
      _
    $region3: #{tpu_custom_call.1} parent=1 // pred_check_branch
      %13 = sbr.rel (0) target = $region5
    $region4: #{tpu_custom_call.1} parent=1 // pred_region
      _
    $region5: #{tpu_custom_call.1} parent=1 // pred_fallthru
      _
    // Predicated region
    $region6: #{tpu_custom_call.1} parent=1 // pred_check
      _
    $region7: #{tpu_custom_call.1} parent=1 // pred_check_branch
      %15 = sbr.rel (0) target = $region9
    $region8: #{tpu_custom_call.1} parent=1 // pred_region
      _
    $region9: #{tpu_custom_call.1} parent=1 // pred_fallthru
      _
    // Predicated region
    $region10: #{tpu_custom_call.1} parent=1 // pred_check
      _
    $region11: #{tpu_custom_call.1} parent=1 // pred_check_branch
      %17 = sbr.rel (0) target = $region13
    $region12: #{tpu_custom_call.1} parent=1 // pred_region
      %19 = vsyncadd [#allocation5], 0
      %s21 = sshll.u32 %s2, 4
      %s22 = int_to_ptr.hbm [resolvable:$true] %s21
      %s23 = sshll.u32 [#allocation4], 4
      %s24 = int_to_ptr.vmem [resolvable:$true] %s23
      %26 = dma.hbm_to_vmem [thread:$0]  %s22, 256, %s24, [#allocation5]
    $region13: #{tpu_custom_call.1} parent=1 // pred_fallthru
      _
    // Predicated region
    $region14: #{tpu_custom_call.1} parent=1 // pred_check
      _
    $region15: #{tpu_custom_call.1} parent=1 // pred_check_branch
      %28 = sbr.rel (0) target = $region17
    $region16: #{tpu_custom_call.1} parent=1 // pred_region
      %30 = dma.done [#allocation5], 256
    $region17: #{tpu_custom_call.1} parent=1 // pred_fallthru
      _
    %s31 = sld [smem:[#allocation3]]
    %p32 = scmp.ne.s32.totalorder %s31, 0
    // Predicated region
    $region18: #{tpu_custom_call.1} parent=1 // pred_check
      %p33 = pneg %p32
    $region19: #{tpu_custom_call.1} parent=1 // pred_check_branch
      %35 = sbr.rel (%p33) target = $region21
    $region20: #{tpu_custom_call.1} parent=1 // pred_region
      %s36 = sld [smem:[#allocation2]]
      %v37 = vld [vmem:[#allocation4] sm:$0xff]
      %v38 = vld [vmem:[#allocation4 + $0x8] sm:$0xff]
      %v39 = vstv %s36
      %v40 = vmul.f32 %v37, %v39
      %v41 = vmul.f32 %v38, %v39
      %v42 = vmax.f32 %v40, 0.0
      %v43 = vmax.f32 %v41, 0.0
      %v44 = vmin.f32 %v42, 1.0
      %v45 = vmin.f32 %v43, 1.0
      %46 = vst [vmem:[#allocation7] sm:$0xff] %v44
      %47 = vst [vmem:[#allocation7 + $0x8] sm:$0xff] %v45
    $region21: #{tpu_custom_call.1} parent=1 // pred_fallthru
      _
    %s48 = sld [smem:[#allocation3]]
    %p49 = scmp.eq.s32.totalorder %s48, 0
    // Predicated region
    $region22: #{tpu_custom_call.1} parent=1 // pred_check
      %p50 = pneg %p49
    $region23: #{tpu_custom_call.1} parent=1 // pred_check_branch
      %52 = sbr.rel (%p50) target = $region25
    $region24: #{tpu_custom_call.1} parent=1 // pred_region
      %v53 = vld [vmem:[#allocation4] sm:$0xff]
      %v54 = vld [vmem:[#allocation4 + $0x8] sm:$0xff]
      %55 = vst [vmem:[#allocation7] sm:$0xff] %v53
      %56 = vst [vmem:[#allocation7 + $0x8] sm:$0xff] %v54
    $region25: #{tpu_custom_call.1} parent=1 // pred_fallthru
      _
    // Predicated region
    $region26: #{tpu_custom_call.1} parent=1 // pred_check
      _
    $region27: #{tpu_custom_call.1} parent=1 // pred_check_branch
      %58 = sbr.rel (0) target = $region29
    $region28: #{tpu_custom_call.1} parent=1 // pred_region
      %60 = vsyncadd [#allocation6], 0
      %s62 = sshll.u32 [#allocation7], 4
      %s63 = int_to_ptr.vmem [resolvable:$true] %s62
      %s64 = sshll.u32 %s3, 4
      %s65 = int_to_ptr.hbm [resolvable:$true] %s64
      %67 = dma.vmem_to_hbm [thread:$0]  %s63, 256, %s65, [#allocation6]
    $region29: #{tpu_custom_call.1} parent=1 // pred_fallthru
      _
    // Predicated region
    $region30: #{tpu_custom_call.1} parent=1 // pred_check
      _
    $region31: #{tpu_custom_call.1} parent=1 // pred_check_branch
      %69 = sbr.rel (0) target = $region33
    $region32: #{tpu_custom_call.1} parent=1 // pred_region
      %71 = dma.done [#allocation6], 256
    $region33: #{tpu_custom_call.1} parent=1 // pred_fallthru
      _
    %72 = vsyncpa [#allocation5], 1
    %73 = vsyncpa [#allocation6], 1

</llo_original>
